<compile_context>
chip_gen: v7x
topology: tpu7x:2x2x1
jax: 0.10.0
libtpu: 0.0.40
codegen_flags: <defaults>
</compile_context>

<pallas_src>
import functools

import jax
import jax.numpy as jnp
from jax.experimental import pallas as pl
from jax.experimental.pallas import tpu as pltpu

LANE = 128     # f32 lane width
SUBLANE = 8    # f32 sublane count
_MIN_SPLIT_ROWS = 512   # only split a single tile in two if halves stay >= this


def _round_up(x, m):
    return (x + m - 1) // m * m


def nwk_kernel(x_ref, w1_ref, b1_ref, w2_ref, b2_ref,
               w3_ref, b3_ref, w4_ref, b4_ref, o_ref, *, values):
    # ---- 4 x (matmul + bias + ReLU) -------------------------------------
    # x arrives f32; cast to bf16 in-kernel for the MXU, accumulate in f32,
    # keep bias/ReLU/LogSoftmax elementwise math in f32 (v5e-safe).
    h = jnp.dot(x_ref[...].astype(jnp.bfloat16), w1_ref[...],
                preferred_element_type=jnp.float32)
    h = jnp.maximum(h + b1_ref[...], 0.0)

    h = jnp.dot(h.astype(jnp.bfloat16), w2_ref[...],
                preferred_element_type=jnp.float32)
    h = jnp.maximum(h + b2_ref[...], 0.0)

    h = jnp.dot(h.astype(jnp.bfloat16), w3_ref[...],
                preferred_element_type=jnp.float32)
    h = jnp.maximum(h + b3_ref[...], 0.0)

    # Last layer produces a lane-dense (128-wide) padded logits tile.
    h = jnp.dot(h.astype(jnp.bfloat16), w4_ref[...],
                preferred_element_type=jnp.float32)
    h = jnp.maximum(h + b4_ref[...], 0.0)   # final ReLU, per the PyTorch forward

    # Pad lanes (>= values) must not contribute to LogSoftmax: mask to -inf.
    lane = jax.lax.broadcasted_iota(jnp.int32, h.shape, dimension=1)
    h = jnp.where(lane < values, h, -jnp.inf)

    # ---- LogSoftmax(dim=-1), numerically stable --------------------------
    m = jnp.max(h, axis=-1, keepdims=True)
    s = h - m
    lse = jnp.log(jnp.sum(jnp.exp(s), axis=-1, keepdims=True))
    o_ref[...] = (s - lse).astype(o_ref.dtype)


def _pick_tile_and_vmem(b_pad, isize, vpad, weights_bytes, batch_tile):
    """Per-generation batch-tile ceiling + vmem_limit_bytes."""
    try:
        vmem_cap = int(getattr(pltpu.get_tpu_info(), "vmem_capacity_bytes"))
    except Exception:  # pragma: no cover - conservative fallback (v7x per-TC)
        vmem_cap = 64 << 20
    vmem_limit = int(min(vmem_cap, 128 << 20) * 0.9)

    # Double-buffered f32 input block + f32 output block per row; weights /
    # biases counted twice (in case the resident blocks are double-buffered).
    per_row_bytes = 2 * isize * 4 + 2 * vpad * 4
    budget = int(vmem_limit * 0.6) - 2 * weights_bytes
    tb_cap = max(SUBLANE, (budget // per_row_bytes) // SUBLANE * SUBLANE)

    tb = max(SUBLANE, min(batch_tile, tb_cap, b_pad) // SUBLANE * SUBLANE)

    # Prefer >= 2 grid steps (dual-TC sharding on v7x) when halves stay big.
    if tb >= b_pad and b_pad >= 2 * _MIN_SPLIT_ROWS:
        tb = _round_up(pl.cdiv(b_pad, 2), SUBLANE)
    return tb, vmem_limit


def nwk_forward(x, params, *, values, batch_tile=2048):
    """x: [B, isize] f32. params: per-layer (W_t [in,out] f32, b [1,out] f32)."""
    B, isize = x.shape
    vpad = _round_up(values, LANE)

    # Pad batch to a sublane multiple only (no rounding to a whole tile —
    # the grid is ragged via pl.cdiv and out-of-range writes are masked).
    b_pad = _round_up(B, SUBLANE)
    if b_pad != B:
        x = jnp.pad(x, ((0, b_pad - B), (0, 0)))
    # NOTE: x stays f32 here; the bf16 MXU cast happens inside the kernel.

    # bf16 weights for the MXU; f32 biases. Hidden layers zero-padded to 128
    # lanes and the last layer padded to `vpad` lanes. Exact: padded columns
    # give ReLU(0 + 0) = 0 and the matching next-layer rows are zero; the
    # pad logits lanes are masked to -inf before LogSoftmax.
    h2, h3 = 128, 128   # padded widths of layers 2 and 3 (64 -> 128, 32 -> 128)
    w1 = params["w1"].astype(jnp.bfloat16)                               # [isize,128]
    w2 = jnp.pad(params["w2"], ((0, 0), (0, h2 - params["w2"].shape[1]))
                 ).astype(jnp.bfloat16)                                  # [128,128]
    w3 = jnp.pad(params["w3"], ((0, h2 - params["w3"].shape[0]),
                                (0, h3 - params["w3"].shape[1]))
                 ).astype(jnp.bfloat16)                                  # [128,128]
    w4 = jnp.pad(params["w4"], ((0, h3 - params["w4"].shape[0]),
                                (0, vpad - values))).astype(jnp.bfloat16)  # [128,vpad]
    b1 = params["b1"]
    b2 = jnp.pad(params["b2"], ((0, 0), (0, h2 - params["b2"].shape[1])))
    b3 = jnp.pad(params["b3"], ((0, 0), (0, h3 - params["b3"].shape[1])))
    b4 = jnp.pad(params["b4"], ((0, 0), (0, vpad - values)))

    weights = (w1, b1, w2, b2, w3, b3, w4, b4)
    weights_bytes = sum(a.size * a.dtype.itemsize for a in weights)

    tb, vmem_limit = _pick_tile_and_vmem(b_pad, isize, vpad, weights_bytes,
                                         batch_tile)
    n_tiles = pl.cdiv(b_pad, tb)

    # Weights/biases: same block every grid step -> stay VMEM-resident.
    def resident(a):
        return pl.BlockSpec(a.shape, lambda i: (0,) * a.ndim)

    flops = 2 * b_pad * (isize * 128 + 128 * 128 + 128 * 128 + 128 * vpad)
    bytes_accessed = (x.size * x.dtype.itemsize        # f32 input, single pass
                      + weights_bytes
                      + b_pad * vpad * 4)              # f32 lane-dense output
    cost = pl.CostEstimate(flops=flops,
                           transcendentals=b_pad * (vpad + 1),
                           bytes_accessed=bytes_accessed)

    out = pl.pallas_call(
        functools.partial(nwk_kernel, values=values),
        out_shape=jax.ShapeDtypeStruct((b_pad, vpad), jnp.float32),
        grid=(n_tiles,),
        in_specs=[
            pl.BlockSpec((tb, isize), lambda i: (i, 0)),   # x: batch-tiled, f32
            resident(w1), resident(b1),
            resident(w2), resident(b2),
            resident(w3), resident(b3),
            resident(w4), resident(b4),
        ],
        out_specs=pl.BlockSpec((tb, vpad), lambda i: (i, 0)),
        compiler_params=pltpu.CompilerParams(
            dimension_semantics=("parallel",),           # v7x: shard over 2 TCs
            vmem_limit_bytes=vmem_limit),
        cost_estimate=cost,
    )(x, w1, b1, w2, b2, w3, b3, w4, b4)

    # Row+lane slice back to the logical logits. (Consumers that can take the
    # padded (b_pad, 128) buffer directly avoid this extra output pass.)
    return out[:B, :values]


def init_params(key, isize, values):
    """Deterministic init mimicking nn.Linear default (U[-1/sqrt(fan_in), +])."""
    dims = [(isize, 128), (128, 64), (64, 32), (32, values)]
    params = {}
    for i, (fan_in, fan_out) in enumerate(dims, start=1):
        key, kw, kb = jax.random.split(key, 3)
        bound = 1.0 / jnp.sqrt(fan_in)
        # stored transposed: [in, out] so each layer is x @ W + b
        params[f"w{i}"] = jax.random.uniform(
            kw, (fan_in, fan_out), jnp.float32, -bound, bound)
        params[f"b{i}"] = jax.random.uniform(
            kb, (1, fan_out), jnp.float32, -bound, bound)
    return params


def nwk_reference(x, p):
    """Pure-jnp reference with the same bf16-MXU / f32-elementwise numerics."""
    h = x
    for i in range(1, 5):
        h = jnp.dot(h.astype(jnp.bfloat16), p[f"w{i}"].astype(jnp.bfloat16),
                    preferred_element_type=jnp.float32)
        h = jnp.maximum(h + p[f"b{i}"], 0.0)
    m = jnp.max(h, axis=-1, keepdims=True)
    s = h - m
    return s - jnp.log(jnp.sum(jnp.exp(s), axis=-1, keepdims=True))


if __name__ == "__main__":
    key = jax.random.PRNGKey(0)
    batch, isize, values = 2, 32, 10

    kx, kp = jax.random.split(key)
    x = jax.random.normal(kx, (batch, isize), jnp.float32)
    params = init_params(kp, isize, values)

    out = nwk_forward(x, params, values=values)
    out = jax.block_until_ready(out)

    ref = nwk_reference(x, params)
    assert out.shape == (batch, values)
    assert bool(jnp.all(jnp.isfinite(out))), "non-finite values in output"
    assert jnp.allclose(out, ref, atol=1e-4, rtol=1e-4), "mismatch vs reference"

    print("KERNEL_OK")
</pallas_src>

<mosaic_0001>
module attributes {stable_mosaic.version = 11 : i64} {
  func.func @nwk_kernel(%arg0: i32, %arg1: memref<8x32xf32, #tpu.memory_space<vmem>>, %arg2: memref<32x128xbf16, #tpu.memory_space<vmem>>, %arg3: memref<1x128xf32, #tpu.memory_space<vmem>>, %arg4: memref<128x128xbf16, #tpu.memory_space<vmem>>, %arg5: memref<1x128xf32, #tpu.memory_space<vmem>>, %arg6: memref<128x128xbf16, #tpu.memory_space<vmem>>, %arg7: memref<1x128xf32, #tpu.memory_space<vmem>>, %arg8: memref<128x128xbf16, #tpu.memory_space<vmem>>, %arg9: memref<1x128xf32, #tpu.memory_space<vmem>>, %arg10: memref<8x128xf32, #tpu.memory_space<vmem>>) attributes {dimension_semantics = [#tpu.dimension_semantics<parallel>], iteration_bounds = array<i64: 1>, scalar_prefetch = 0 : i64, scratch_operands = 0 : i64, tpu.core_type = #tpu.core_type<tc>, window_params = [{transform_indices = @transform_0, window_bounds = array<i64: 8, 32>}, {pipeline_mode = #tpu.pipeline_mode<synchronous>, transform_indices = @transform_1, window_bounds = array<i64: 32, 128>}, {pipeline_mode = #tpu.pipeline_mode<synchronous>, transform_indices = @transform_2, window_bounds = array<i64: 1, 128>}, {pipeline_mode = #tpu.pipeline_mode<synchronous>, transform_indices = @transform_3, window_bounds = array<i64: 128, 128>}, {pipeline_mode = #tpu.pipeline_mode<synchronous>, transform_indices = @transform_4, window_bounds = array<i64: 1, 128>}, {pipeline_mode = #tpu.pipeline_mode<synchronous>, transform_indices = @transform_5, window_bounds = array<i64: 128, 128>}, {pipeline_mode = #tpu.pipeline_mode<synchronous>, transform_indices = @transform_6, window_bounds = array<i64: 1, 128>}, {pipeline_mode = #tpu.pipeline_mode<synchronous>, transform_indices = @transform_7, window_bounds = array<i64: 128, 128>}, {pipeline_mode = #tpu.pipeline_mode<synchronous>, transform_indices = @transform_8, window_bounds = array<i64: 1, 128>}, {transform_indices = @transform_9, window_bounds = array<i64: 8, 128>}]} {
    %c0 = arith.constant 0 : index
    %c0_0 = arith.constant 0 : index
    %0 = vector.load %arg1[%c0, %c0_0] : memref<8x32xf32, #tpu.memory_space<vmem>>, vector<8x32xf32>
    %1 = arith.truncf %0 : vector<8x32xf32> to vector<8x32xbf16>
    %c0_1 = arith.constant 0 : index
    %c0_2 = arith.constant 0 : index
    %2 = vector.load %arg2[%c0_1, %c0_2] : memref<32x128xbf16, #tpu.memory_space<vmem>>, vector<32x128xbf16>
    %cst = arith.constant dense<0.000000e+00> : vector<8x128xf32>
    %3 = tpu.matmul %1, %2, %cst {dimension_numbers = #tpu.dot_dimension_numbers<[1], [0], [0], [1], [0, 0, 1, 1], [], []>} : vector<8x32xbf16>, vector<32x128xbf16>, vector<8x128xf32> -> vector<8x128xf32>
    %c0_3 = arith.constant 0 : index
    %c0_4 = arith.constant 0 : index
    %4 = vector.load %arg3[%c0_3, %c0_4] : memref<1x128xf32, #tpu.memory_space<vmem>>, vector<1x128xf32>
    %5 = vector.broadcast %4 : vector<1x128xf32> to vector<8x128xf32>
    %6 = arith.addf %3, %5 : vector<8x128xf32>
    %cst_5 = arith.constant 0.000000e+00 : f32
    %7 = vector.broadcast %cst_5 : f32 to vector<8x128xf32>
    %8 = arith.maximumf %6, %7 : vector<8x128xf32>
    %9 = arith.truncf %8 : vector<8x128xf32> to vector<8x128xbf16>
    %c0_6 = arith.constant 0 : index
    %c0_7 = arith.constant 0 : index
    %10 = vector.load %arg4[%c0_6, %c0_7] : memref<128x128xbf16, #tpu.memory_space<vmem>>, vector<128x128xbf16>
    %cst_8 = arith.constant dense<0.000000e+00> : vector<8x128xf32>
    %11 = tpu.matmul %9, %10, %cst_8 {dimension_numbers = #tpu.dot_dimension_numbers<[1], [0], [0], [1], [0, 0, 1, 1], [], []>} : vector<8x128xbf16>, vector<128x128xbf16>, vector<8x128xf32> -> vector<8x128xf32>
    %c0_9 = arith.constant 0 : index
    %c0_10 = arith.constant 0 : index
    %12 = vector.load %arg5[%c0_9, %c0_10] : memref<1x128xf32, #tpu.memory_space<vmem>>, vector<1x128xf32>
    %13 = vector.broadcast %12 : vector<1x128xf32> to vector<8x128xf32>
    %14 = arith.addf %11, %13 : vector<8x128xf32>
    %cst_11 = arith.constant 0.000000e+00 : f32
    %15 = vector.broadcast %cst_11 : f32 to vector<8x128xf32>
    %16 = arith.maximumf %14, %15 : vector<8x128xf32>
    %17 = arith.truncf %16 : vector<8x128xf32> to vector<8x128xbf16>
    %c0_12 = arith.constant 0 : index
    %c0_13 = arith.constant 0 : index
    %18 = vector.load %arg6[%c0_12, %c0_13] : memref<128x128xbf16, #tpu.memory_space<vmem>>, vector<128x128xbf16>
    %cst_14 = arith.constant dense<0.000000e+00> : vector<8x128xf32>
    %19 = tpu.matmul %17, %18, %cst_14 {dimension_numbers = #tpu.dot_dimension_numbers<[1], [0], [0], [1], [0, 0, 1, 1], [], []>} : vector<8x128xbf16>, vector<128x128xbf16>, vector<8x128xf32> -> vector<8x128xf32>
    %c0_15 = arith.constant 0 : index
    %c0_16 = arith.constant 0 : index
    %20 = vector.load %arg7[%c0_15, %c0_16] : memref<1x128xf32, #tpu.memory_space<vmem>>, vector<1x128xf32>
    %21 = vector.broadcast %20 : vector<1x128xf32> to vector<8x128xf32>
    %22 = arith.addf %19, %21 : vector<8x128xf32>
    %cst_17 = arith.constant 0.000000e+00 : f32
    %23 = vector.broadcast %cst_17 : f32 to vector<8x128xf32>
    %24 = arith.maximumf %22, %23 : vector<8x128xf32>
    %25 = arith.truncf %24 : vector<8x128xf32> to vector<8x128xbf16>
    %c0_18 = arith.constant 0 : index
    %c0_19 = arith.constant 0 : index
    %26 = vector.load %arg8[%c0_18, %c0_19] : memref<128x128xbf16, #tpu.memory_space<vmem>>, vector<128x128xbf16>
    %cst_20 = arith.constant dense<0.000000e+00> : vector<8x128xf32>
    %27 = tpu.matmul %25, %26, %cst_20 {dimension_numbers = #tpu.dot_dimension_numbers<[1], [0], [0], [1], [0, 0, 1, 1], [], []>} : vector<8x128xbf16>, vector<128x128xbf16>, vector<8x128xf32> -> vector<8x128xf32>
    %c0_21 = arith.constant 0 : index
    %c0_22 = arith.constant 0 : index
    %28 = vector.load %arg9[%c0_21, %c0_22] : memref<1x128xf32, #tpu.memory_space<vmem>>, vector<1x128xf32>
    %29 = vector.broadcast %28 : vector<1x128xf32> to vector<8x128xf32>
    %30 = arith.addf %27, %29 : vector<8x128xf32>
    %cst_23 = arith.constant 0.000000e+00 : f32
    %31 = vector.broadcast %cst_23 : f32 to vector<8x128xf32>
    %32 = arith.maximumf %30, %31 : vector<8x128xf32>
    %33 = tpu.iota {dimensions = array<i32: 1>} : vector<8x128xi32>
    %c10_i32 = arith.constant 10 : i32
    %34 = vector.broadcast %c10_i32 : i32 to vector<8x128xi32>
    %35 = arith.cmpi slt, %33, %34 : vector<8x128xi32>
    %cst_24 = arith.constant 0xFF800000 : f32
    %36 = vector.broadcast %cst_24 : f32 to vector<8x128xf32>
    %37 = arith.select %35, %32, %36 : vector<8x128xi1>, vector<8x128xf32>
    %cst_25 = arith.constant dense<0xFF800000> : vector<8xf32>
    %38 = vector.multi_reduction <maximumf>, %37, %cst_25 [1] : vector<8x128xf32> to vector<8xf32>
    %39 = vector.shape_cast %38 : vector<8xf32> to vector<8x1xf32>
    %40 = vector.broadcast %39 : vector<8x1xf32> to vector<8x128xf32>
    %41 = arith.subf %37, %40 : vector<8x128xf32>
    %42 = math.exp %41 : vector<8x128xf32>
    %cst_26 = arith.constant dense<0.000000e+00> : vector<8xf32>
    %43 = vector.multi_reduction <add>, %42, %cst_26 [1] : vector<8x128xf32> to vector<8xf32>
    %44 = vector.shape_cast %43 : vector<8xf32> to vector<8x1xf32>
    %45 = math.log %44 : vector<8x1xf32>
    %46 = vector.broadcast %45 : vector<8x1xf32> to vector<8x128xf32>
    %47 = arith.subf %41, %46 : vector<8x128xf32>
    %c0_27 = arith.constant 0 : index
    %c0_28 = arith.constant 0 : index
    %48 = vector.load %arg10[%c0_27, %c0_28] : memref<8x128xf32, #tpu.memory_space<vmem>>, vector<8x128xf32>
    tpu.vector_store %arg10[%c0_27, %c0_28], %47 {strides = array<i32>} : memref<8x128xf32, #tpu.memory_space<vmem>>, vector<8x128xf32>,
    return
  }
  func.func @transform_0(%arg0: i32) -> (i32, i32) {
    %c0_i32 = arith.constant 0 : i32
    %c0_i32_0 = arith.constant 0 : i32
    return %arg0, %c0_i32 : i32, i32
  }
  func.func @transform_1(%arg0: i32) -> (i32, i32) {
    %c0_i32 = arith.constant 0 : i32
    %c0_i32_0 = arith.constant 0 : i32
    %c0_i32_1 = arith.constant 0 : i32
    return %c0_i32, %c0_i32_0 : i32, i32
  }
  func.func @transform_2(%arg0: i32) -> (i32, i32) {
    %c0_i32 = arith.constant 0 : i32
    %c0_i32_0 = arith.constant 0 : i32
    %c0_i32_1 = arith.constant 0 : i32
    return %c0_i32, %c0_i32_0 : i32, i32
  }
  func.func @transform_3(%arg0: i32) -> (i32, i32) {
    %c0_i32 = arith.constant 0 : i32
    %c0_i32_0 = arith.constant 0 : i32
    %c0_i32_1 = arith.constant 0 : i32
    return %c0_i32, %c0_i32_0 : i32, i32
  }
  func.func @transform_4(%arg0: i32) -> (i32, i32) {
    %c0_i32 = arith.constant 0 : i32
    %c0_i32_0 = arith.constant 0 : i32
    %c0_i32_1 = arith.constant 0 : i32
    return %c0_i32, %c0_i32_0 : i32, i32
  }
  func.func @transform_5(%arg0: i32) -> (i32, i32) {
    %c0_i32 = arith.constant 0 : i32
    %c0_i32_0 = arith.constant 0 : i32
    %c0_i32_1 = arith.constant 0 : i32
    return %c0_i32, %c0_i32_0 : i32, i32
  }
  func.func @transform_6(%arg0: i32) -> (i32, i32) {
    %c0_i32 = arith.constant 0 : i32
    %c0_i32_0 = arith.constant 0 : i32
    %c0_i32_1 = arith.constant 0 : i32
    return %c0_i32, %c0_i32_0 : i32, i32
  }
  func.func @transform_7(%arg0: i32) -> (i32, i32) {
    %c0_i32 = arith.constant 0 : i32
    %c0_i32_0 = arith.constant 0 : i32
    %c0_i32_1 = arith.constant 0 : i32
    return %c0_i32, %c0_i32_0 : i32, i32
  }
  func.func @transform_8(%arg0: i32) -> (i32, i32) {
    %c0_i32 = arith.constant 0 : i32
    %c0_i32_0 = arith.constant 0 : i32
    %c0_i32_1 = arith.constant 0 : i32
    return %c0_i32, %c0_i32_0 : i32, i32
  }
  func.func @transform_9(%arg0: i32) -> (i32, i32) {
    %c0_i32 = arith.constant 0 : i32
    %c0_i32_0 = arith.constant 0 : i32
    return %arg0, %c0_i32 : i32, i32
  }
}

</mosaic_0001>

<llo_original>
// kernel: tpu_custom_call.1
$region0: #{tpu_custom_call.1}
  #allocation0 [shape = 'u32[]', space=smem, size = 0x4, offset = 0x4, fixed_abs, tag = 'smem constant byte address 0x4 - core index']
  #allocation1 [shape = 'u32[144,128]{1,0:T(1,128)}', space=vmem, size = 0x12000, scoped, tag = 'internal scratch']
  %s0 = inlined_call_operand.hbm [shape: f32[8,32], index: 0, kind: input, shape index: {}]
  %s1 = inlined_call_operand.hbm [shape: bf16[32,128], index: 1, kind: input, shape index: {}]
  %s2 = inlined_call_operand.vmem [shape: f32[1,128], index: 2, kind: input, shape index: {}]
  %s3 = inlined_call_operand.hbm [shape: bf16[128,128], index: 3, kind: input, shape index: {}]
  %s4 = inlined_call_operand.vmem [shape: f32[1,128], index: 4, kind: input, shape index: {}]
  %s5 = inlined_call_operand.hbm [shape: bf16[128,128], index: 5, kind: input, shape index: {}]
  %s6 = inlined_call_operand.vmem [shape: f32[1,128], index: 6, kind: input, shape index: {}]
  %s7 = inlined_call_operand.hbm [shape: bf16[128,128], index: 7, kind: input, shape index: {}]
  %s8 = inlined_call_operand.vmem [shape: f32[1,128], index: 8, kind: input, shape index: {}]
  %s9 = inlined_call_operand.hbm [shape: f32[8,128], index: 9, kind: output, shape index: {}]
  %s10 = sld [smem:[#allocation0]]
  $region66: #{tpu_custom_call.1} parent=0
    _
  %s12 = ssub.s32 1, %s10
  %s13 = scalar_select 0, %s12, %s10
  $region1: #{tpu_custom_call.1} parent=0
    #allocation2 [shape = 'u8[4096]{0}', space=vmem, size = 0x1000, scoped, tag = 'input window, operand 0, single buffered']
    #allocation3 [shape = 's32[1]{0}', space=sflag, size = 0x4, scoped, tag = 'scoped memory for tpu_custom_call.1']
    #allocation4 [shape = 's32[1]{0}', space=sflag, size = 0x4, scoped, tag = 'scoped memory for tpu_custom_call.1']
    #allocation5 [shape = 'u8[8192]{0}', space=vmem, size = 0x2000, scoped, tag = 'input window, operand 1, single buffered']
    #allocation6 [shape = 's32[1]{0}', space=sflag, size = 0x4, scoped, tag = 'scoped memory for tpu_custom_call.1']
    #allocation7 [shape = 'u8[32768]{0}', space=vmem, size = 0x8000, scoped, tag = 'input window, operand 3, single buffered']
    #allocation8 [shape = 'u8[32768]{0}', space=vmem, size = 0x8000, scoped, tag = 'input window, operand 5, single buffered']
    #allocation9 [shape = 's32[1]{0}', space=sflag, size = 0x4, scoped, tag = 'scoped memory for tpu_custom_call.1']
    #allocation10 [shape = 'u8[32768]{0}', space=vmem, size = 0x8000, scoped, tag = 'input window, operand 7, single buffered']
    #allocation11 [shape = 'u8[4096]{0}', space=vmem, size = 0x1000, scoped, tag = 'output window, operand 0, single buffered']
    %14 = vsyncpa [#allocation3], 0
    %15 = vsyncpa [#allocation6], 0
    %16 = vsyncpa [#allocation9], 0
    %17 = vsyncpa [#allocation4], 0
    // Predicated region
    $region2: #{tpu_custom_call.1} parent=1 // pred_check
      _
    $region3: #{tpu_custom_call.1} parent=1 // pred_check_branch
      %19 = sbr.rel (0) target = $region5
    $region4: #{tpu_custom_call.1} parent=1 // pred_region
      %s21 = ssub.s32 128, 128
      %22 = vsyncadd [#allocation3], %s21
      %s24 = sshll.u32 [#allocation2], 4
      %s25 = int_to_ptr.vmem [resolvable:$true] %s24
      %27 = dma.hbm_to_vmem [thread:$0]  %s0, 128, %s25, [#allocation3]
    $region5: #{tpu_custom_call.1} parent=1 // pred_fallthru
      _
    // Predicated region
    $region6: #{tpu_custom_call.1} parent=1 // pred_check
      _
    $region7: #{tpu_custom_call.1} parent=1 // pred_check_branch
      %29 = sbr.rel (0) target = $region9
    $region8: #{tpu_custom_call.1} parent=1 // pred_region
      %s31 = ssub.s32 256, 256
      %32 = vsyncadd [#allocation6], %s31
      %s33 = sshll.u32 [#allocation5], 4
      %s34 = int_to_ptr.vmem [resolvable:$true] %s33
      %39 = dma.hbm_to_vmem [thread:$0]  %s1, 256, %s34, [#allocation6], 64, 64, 4
    $region9: #{tpu_custom_call.1} parent=1 // pred_fallthru
      _
    // Predicated region
    $region10: #{tpu_custom_call.1} parent=1 // pred_check
      _
    $region11: #{tpu_custom_call.1} parent=1 // pred_check_branch
      %41 = sbr.rel (0) target = $region13
    $region12: #{tpu_custom_call.1} parent=1 // pred_region
      _
    $region13: #{tpu_custom_call.1} parent=1 // pred_fallthru
      _
    // Predicated region
    $region14: #{tpu_custom_call.1} parent=1 // pred_check
      _
    $region15: #{tpu_custom_call.1} parent=1 // pred_check_branch
      %43 = sbr.rel (0) target = $region17
    $region16: #{tpu_custom_call.1} parent=1 // pred_region
      %s45 = ssub.s32 1024, 1024
      %46 = vsyncadd [#allocation6], %s45
      %s47 = sshll.u32 [#allocation7], 4
      %s48 = int_to_ptr.vmem [resolvable:$true] %s47
      %53 = dma.hbm_to_vmem [thread:$0]  %s3, 1024, %s48, [#allocation6], 64, 64, 4
    $region17: #{tpu_custom_call.1} parent=1 // pred_fallthru
      _
    // Predicated region
    $region18: #{tpu_custom_call.1} parent=1 // pred_check
      _
    $region19: #{tpu_custom_call.1} parent=1 // pred_check_branch
      %55 = sbr.rel (0) target = $region21
    $region20: #{tpu_custom_call.1} parent=1 // pred_region
      _
    $region21: #{tpu_custom_call.1} parent=1 // pred_fallthru
      _
    // Predicated region
    $region22: #{tpu_custom_call.1} parent=1 // pred_check
      _
    $region23: #{tpu_custom_call.1} parent=1 // pred_check_branch
      %57 = sbr.rel (0) target = $region25
    $region24: #{tpu_custom_call.1} parent=1 // pred_region
      %s59 = ssub.s32 1024, 1024
      %60 = vsyncadd [#allocation9], %s59
      %s61 = sshll.u32 [#allocation8], 4
      %s62 = int_to_ptr.vmem [resolvable:$true] %s61
      %67 = dma.hbm_to_vmem [thread:$0]  %s5, 1024, %s62, [#allocation9], 64, 64, 4
    $region25: #{tpu_custom_call.1} parent=1 // pred_fallthru
      _
    // Predicated region
    $region26: #{tpu_custom_call.1} parent=1 // pred_check
      _
    $region27: #{tpu_custom_call.1} parent=1 // pred_check_branch
      %69 = sbr.rel (0) target = $region29
    $region28: #{tpu_custom_call.1} parent=1 // pred_region
      _
    $region29: #{tpu_custom_call.1} parent=1 // pred_fallthru
      _
    // Predicated region
    $region30: #{tpu_custom_call.1} parent=1 // pred_check
      _
    $region31: #{tpu_custom_call.1} parent=1 // pred_check_branch
      %71 = sbr.rel (0) target = $region33
    $region32: #{tpu_custom_call.1} parent=1 // pred_region
      %s73 = ssub.s32 1024, 1024
      %74 = vsyncadd [#allocation9], %s73
      %s75 = sshll.u32 [#allocation10], 4
      %s76 = int_to_ptr.vmem [resolvable:$true] %s75
      %81 = dma.hbm_to_vmem [thread:$0]  %s7, 1024, %s76, [#allocation9], 64, 64, 4
    $region33: #{tpu_custom_call.1} parent=1 // pred_fallthru
      _
    // Predicated region
    $region34: #{tpu_custom_call.1} parent=1 // pred_check
      _
    $region35: #{tpu_custom_call.1} parent=1 // pred_check_branch
      %83 = sbr.rel (0) target = $region37
    $region36: #{tpu_custom_call.1} parent=1 // pred_region
      _
    $region37: #{tpu_custom_call.1} parent=1 // pred_fallthru
      _
    // Predicated region
    $region38: #{tpu_custom_call.1} parent=1 // pred_check
      _
    $region39: #{tpu_custom_call.1} parent=1 // pred_check_branch
      %85 = sbr.rel (0) target = $region41
    $region40: #{tpu_custom_call.1} parent=1 // pred_region
      %86 = dma.done [#allocation3], 128
    $region41: #{tpu_custom_call.1} parent=1 // pred_fallthru
      _
    // Predicated region
    $region42: #{tpu_custom_call.1} parent=1 // pred_check
      _
    $region43: #{tpu_custom_call.1} parent=1 // pred_check_branch
      %88 = sbr.rel (0) target = $region45
    $region44: #{tpu_custom_call.1} parent=1 // pred_region
      %89 = dma.done [#allocation6], 256
    $region45: #{tpu_custom_call.1} parent=1 // pred_fallthru
      _
    // Predicated region
    $region46: #{tpu_custom_call.1} parent=1 // pred_check
      _
    $region47: #{tpu_custom_call.1} parent=1 // pred_check_branch
      %91 = sbr.rel (0) target = $region49
    $region48: #{tpu_custom_call.1} parent=1 // pred_region
      %92 = dma.done [#allocation6], 1024
    $region49: #{tpu_custom_call.1} parent=1 // pred_fallthru
      _
    // Predicated region
    $region50: #{tpu_custom_call.1} parent=1 // pred_check
      _
    $region51: #{tpu_custom_call.1} parent=1 // pred_check_branch
      %94 = sbr.rel (0) target = $region53
    $region52: #{tpu_custom_call.1} parent=1 // pred_region
      %95 = dma.done [#allocation9], 1024
    $region53: #{tpu_custom_call.1} parent=1 // pred_fallthru
      _
    // Predicated region
    $region54: #{tpu_custom_call.1} parent=1 // pred_check
      _
    $region55: #{tpu_custom_call.1} parent=1 // pred_check_branch
      %97 = sbr.rel (0) target = $region57
    $region56: #{tpu_custom_call.1} parent=1 // pred_region
      %98 = dma.done [#allocation9], 1024
    $region57: #{tpu_custom_call.1} parent=1 // pred_fallthru
      _
    %v100 = vld [vmem:[#allocation2] sm:$0xff]
    %v101 = vpack.c.bf16 %v100, %v100
    %v102 = vld [vmem:[#allocation5] sm:$0xf]
    %v103 = vld [vmem:[#allocation5 + $0x4] sm:$0xf]
    %v104 = vld [vmem:[#allocation5 + $0x8] sm:$0xf]
    %v105 = vld [vmem:[#allocation5 + $0xc] sm:$0xf]
    %v106 = vld [vmem:[%s2] sm:$0x1]
    %v108 = vlaneseq
    %v109 = vshrl.u32 %v108, 7
    %v110 = vsub.s32 0, %v109
    %v111 = vrot.slane %v106, %v110
    %v117 = vunpack.c.l.b16 %v102
    %v118 = vunpack.c.l.b16 %v103
    %v119 = vunpack.c.l.b16 %v104
    %v120 = vunpack.c.l.b16 %v105
    %v121 = vpack.c.b16 %v118, %v117
    %v122 = vpack.c.b16 %v120, %v119
    %vm125 = vcmask 261120
    %v127 = vsel %vm125, %v101, 0
    %129 = vmatprep.subr.bf16.mxu0 0
    %130 = vmatpush1.bf16.msra.mxu0 %v121
    %131 = vmatprep.subr.bf16.mxu0 0
    %132 = vmatpush1.bf16.msra.mxu0 %v122
    %133 = vmatprep.subr.bf16.mxu0 0
    %134 = vmatpush1.bf16.msra.mxu0 0
    %135 = vmatprep.subr.bf16.mxu0 0
    %136 = vmatpush1.bf16.msra.mxu0 0
    %137 = vmatprep.subr.bf16.mxu0 0
    %138 = vmatpush1.bf16.msra.mxu0 0
    %139 = vmatprep.subr.bf16.mxu0 0
    %140 = vmatpush1.bf16.msra.mxu0 0
    %141 = vmatprep.subr.bf16.mxu0 0
    %142 = vmatpush1.bf16.msra.mxu0 0
    %143 = vmatprep.subr.bf16.mxu0 0
    %144 = vmatpush1.bf16.msra.mxu0 0
    %145 = vmatprep.subr.bf16.mxu0 0
    %146 = vmatpush1.bf16.msra.mxu0 0
    %147 = vmatprep.subr.bf16.mxu0 0
    %148 = vmatpush1.bf16.msra.mxu0 0
    %149 = vmatprep.subr.bf16.mxu0 0
    %150 = vmatpush1.bf16.msra.mxu0 0
    %151 = vmatprep.subr.bf16.mxu0 0
    %152 = vmatpush1.bf16.msra.mxu0 0
    %153 = vmatprep.subr.bf16.mxu0 0
    %154 = vmatpush1.bf16.msra.mxu0 0
    %155 = vmatprep.subr.bf16.mxu0 0
    %156 = vmatpush1.bf16.msra.mxu0 0
    %157 = vmatprep.subr.bf16.mxu0 0
    %158 = vmatpush1.bf16.msra.mxu0 0
    %159 = vmatprep.subr.bf16.mxu0 0
    %160 = vmatpush1.bf16.msra.mxu0 0
    %161 = vmatprep.mubr.bf16.mxu0 0
    %162 = vmatmul.mubr.bf16.gmra.mrb[0].mxu0 %v127
    %v163 = vpop.f32.mrb[0].mxu0
    %v164 = vadd.f32 %v111, %v163
    %v165 = vpop.f32.mrb[0].mxu0
    %v166 = vpop.f32.mrb[0].mxu0
    %v167 = vpop.f32.mrb[0].mxu0
    %168 = vdwg.mxu0
    %v169 = vmax.f32 %v164, 0.0
    %v170 = vpack.c.bf16 %v169, %v169
    %v171 = vld [vmem:[#allocation7] sm:$0xf]
    %v172 = vld [vmem:[#allocation7 + $0x4] sm:$0xf]
    %v173 = vld [vmem:[#allocation7 + $0x8] sm:$0xf]
    %v174 = vld [vmem:[#allocation7 + $0xc] sm:$0xf]
    %v175 = vld [vmem:[#allocation7 + $0x10] sm:$0xf]
    %v176 = vld [vmem:[#allocation7 + $0x14] sm:$0xf]
    %v177 = vld [vmem:[#allocation7 + $0x18] sm:$0xf]
    %v178 = vld [vmem:[#allocation7 + $0x1c] sm:$0xf]
    %v179 = vld [vmem:[#allocation7 + $0x20] sm:$0xf]
    %v180 = vld [vmem:[#allocation7 + $0x24] sm:$0xf]
    %v181 = vld [vmem:[#allocation7 + $0x28] sm:$0xf]
    %v182 = vld [vmem:[#allocation7 + $0x2c] sm:$0xf]
    %v183 = vld [vmem:[#allocation7 + $0x30] sm:$0xf]
    %v184 = vld [vmem:[#allocation7 + $0x34] sm:$0xf]
    %v185 = vld [vmem:[#allocation7 + $0x38] sm:$0xf]
    %v186 = vld [vmem:[#allocation7 + $0x3c] sm:$0xf]
    %v187 = vld [vmem:[%s4] sm:$0x1]
    %v189 = vlaneseq
    %v190 = vshrl.u32 %v189, 7
    %v191 = vsub.s32 0, %v190
    %v192 = vrot.slane %v187, %v191
    %v210 = vunpack.c.l.b16 %v171
    %v211 = vunpack.c.l.b16 %v172
    %v212 = vunpack.c.l.b16 %v173
    %v213 = vunpack.c.l.b16 %v174
    %v214 = vunpack.c.l.b16 %v175
    %v215 = vunpack.c.l.b16 %v176
    %v216 = vunpack.c.l.b16 %v177
    %v217 = vunpack.c.l.b16 %v178
    %v218 = vunpack.c.l.b16 %v179
    %v219 = vunpack.c.l.b16 %v180
    %v220 = vunpack.c.l.b16 %v181
    %v221 = vunpack.c.l.b16 %v182
    %v222 = vunpack.c.l.b16 %v183
    %v223 = vunpack.c.l.b16 %v184
    %v224 = vunpack.c.l.b16 %v185
    %v225 = vunpack.c.l.b16 %v186
    %v226 = vpack.c.b16 %v211, %v210
    %v227 = vpack.c.b16 %v213, %v212
    %v228 = vpack.c.b16 %v215, %v214
    %v229 = vpack.c.b16 %v217, %v216
    %v230 = vpack.c.b16 %v219, %v218
    %v231 = vpack.c.b16 %v221, %v220
    %v232 = vpack.c.b16 %v223, %v222
    %v233 = vpack.c.b16 %v225, %v224
    %242 = vmatprep.subr.bf16.mxu0 0
    %243 = vmatpush1.bf16.msra.mxu0 %v226
    %244 = vmatprep.subr.bf16.mxu0 0
    %245 = vmatpush1.bf16.msra.mxu0 %v227
    %246 = vmatprep.subr.bf16.mxu0 0
    %247 = vmatpush1.bf16.msra.mxu0 %v228
    %248 = vmatprep.subr.bf16.mxu0 0
    %249 = vmatpush1.bf16.msra.mxu0 %v229
    %250 = vmatprep.subr.bf16.mxu0 0
    %251 = vmatpush1.bf16.msra.mxu0 %v230
    %252 = vmatprep.subr.bf16.mxu0 0
    %253 = vmatpush1.bf16.msra.mxu0 %v231
    %254 = vmatprep.subr.bf16.mxu0 0
    %255 = vmatpush1.bf16.msra.mxu0 %v232
    %256 = vmatprep.subr.bf16.mxu0 0
    %257 = vmatpush1.bf16.msra.mxu0 %v233
    %258 = vmatprep.subr.bf16.mxu0 0
    %259 = vmatpush1.bf16.msra.mxu0 0
    %260 = vmatprep.subr.bf16.mxu0 0
    %261 = vmatpush1.bf16.msra.mxu0 0
    %262 = vmatprep.subr.bf16.mxu0 0
    %263 = vmatpush1.bf16.msra.mxu0 0
    %264 = vmatprep.subr.bf16.mxu0 0
    %265 = vmatpush1.bf16.msra.mxu0 0
    %266 = vmatprep.subr.bf16.mxu0 0
    %267 = vmatpush1.bf16.msra.mxu0 0
    %268 = vmatprep.subr.bf16.mxu0 0
    %269 = vmatpush1.bf16.msra.mxu0 0
    %270 = vmatprep.subr.bf16.mxu0 0
    %271 = vmatpush1.bf16.msra.mxu0 0
    %272 = vmatprep.subr.bf16.mxu0 0
    %273 = vmatpush1.bf16.msra.mxu0 0
    %274 = vmatprep.mubr.bf16.mxu0 0
    %275 = vmatmul.mubr.bf16.gmra.mrb[0].mxu0 %v170
    %v276 = vpop.f32.mrb[0].mxu0
    %v277 = vadd.f32 %v192, %v276
    %v278 = vpop.f32.mrb[0].mxu0
    %v279 = vpop.f32.mrb[0].mxu0
    %v280 = vpop.f32.mrb[0].mxu0
    %281 = vdwg.mxu0
    %v282 = vmax.f32 %v277, 0.0
    %v283 = vpack.c.bf16 %v282, %v282
    %v284 = vld [vmem:[#allocation8] sm:$0xf]
    %v285 = vld [vmem:[#allocation8 + $0x4] sm:$0xf]
    %v286 = vld [vmem:[#allocation8 + $0x8] sm:$0xf]
    %v287 = vld [vmem:[#allocation8 + $0xc] sm:$0xf]
    %v288 = vld [vmem:[#allocation8 + $0x10] sm:$0xf]
    %v289 = vld [vmem:[#allocation8 + $0x14] sm:$0xf]
    %v290 = vld [vmem:[#allocation8 + $0x18] sm:$0xf]
    %v291 = vld [vmem:[#allocation8 + $0x1c] sm:$0xf]
    %v292 = vld [vmem:[#allocation8 + $0x20] sm:$0xf]
    %v293 = vld [vmem:[#allocation8 + $0x24] sm:$0xf]
    %v294 = vld [vmem:[#allocation8 + $0x28] sm:$0xf]
    %v295 = vld [vmem:[#allocation8 + $0x2c] sm:$0xf]
    %v296 = vld [vmem:[#allocation8 + $0x30] sm:$0xf]
    %v297 = vld [vmem:[#allocation8 + $0x34] sm:$0xf]
    %v298 = vld [vmem:[#allocation8 + $0x38] sm:$0xf]
    %v299 = vld [vmem:[#allocation8 + $0x3c] sm:$0xf]
    %v300 = vld [vmem:[%s6] sm:$0x1]
    %v302 = vlaneseq
    %v303 = vshrl.u32 %v302, 7
    %v304 = vsub.s32 0, %v303
    %v305 = vrot.slane %v300, %v304
    %v323 = vunpack.c.l.b16 %v284
    %v324 = vunpack.c.l.b16 %v285
    %v325 = vunpack.c.l.b16 %v286
    %v326 = vunpack.c.l.b16 %v287
    %v327 = vunpack.c.l.b16 %v288
    %v328 = vunpack.c.l.b16 %v289
    %v329 = vunpack.c.l.b16 %v290
    %v330 = vunpack.c.l.b16 %v291
    %v331 = vunpack.c.l.b16 %v292
    %v332 = vunpack.c.l.b16 %v293
    %v333 = vunpack.c.l.b16 %v294
    %v334 = vunpack.c.l.b16 %v295
    %v335 = vunpack.c.l.b16 %v296
    %v336 = vunpack.c.l.b16 %v297
    %v337 = vunpack.c.l.b16 %v298
    %v338 = vunpack.c.l.b16 %v299
    %v339 = vpack.c.b16 %v324, %v323
    %v340 = vpack.c.b16 %v326, %v325
    %v341 = vpack.c.b16 %v328, %v327
    %v342 = vpack.c.b16 %v330, %v329
    %v343 = vpack.c.b16 %v332, %v331
    %v344 = vpack.c.b16 %v334, %v333
    %v345 = vpack.c.b16 %v336, %v335
    %v346 = vpack.c.b16 %v338, %v337
    %355 = vmatprep.subr.bf16.mxu0 0
    %356 = vmatpush1.bf16.msra.mxu0 %v339
    %357 = vmatprep.subr.bf16.mxu0 0
    %358 = vmatpush1.bf16.msra.mxu0 %v340
    %359 = vmatprep.subr.bf16.mxu0 0
    %360 = vmatpush1.bf16.msra.mxu0 %v341
    %361 = vmatprep.subr.bf16.mxu0 0
    %362 = vmatpush1.bf16.msra.mxu0 %v342
    %363 = vmatprep.subr.bf16.mxu0 0
    %364 = vmatpush1.bf16.msra.mxu0 %v343
    %365 = vmatprep.subr.bf16.mxu0 0
    %366 = vmatpush1.bf16.msra.mxu0 %v344
    %367 = vmatprep.subr.bf16.mxu0 0
    %368 = vmatpush1.bf16.msra.mxu0 %v345
    %369 = vmatprep.subr.bf16.mxu0 0
    %370 = vmatpush1.bf16.msra.mxu0 %v346
    %371 = vmatprep.subr.bf16.mxu0 0
    %372 = vmatpush1.bf16.msra.mxu0 0
    %373 = vmatprep.subr.bf16.mxu0 0
    %374 = vmatpush1.bf16.msra.mxu0 0
    %375 = vmatprep.subr.bf16.mxu0 0
    %376 = vmatpush1.bf16.msra.mxu0 0
    %377 = vmatprep.subr.bf16.mxu0 0
    %378 = vmatpush1.bf16.msra.mxu0 0
    %379 = vmatprep.subr.bf16.mxu0 0
    %380 = vmatpush1.bf16.msra.mxu0 0
    %381 = vmatprep.subr.bf16.mxu0 0
    %382 = vmatpush1.bf16.msra.mxu0 0
    %383 = vmatprep.subr.bf16.mxu0 0
    %384 = vmatpush1.bf16.msra.mxu0 0
    %385 = vmatprep.subr.bf16.mxu0 0
    %386 = vmatpush1.bf16.msra.mxu0 0
    %387 = vmatprep.mubr.bf16.mxu0 0
    %388 = vmatmul.mubr.bf16.gmra.mrb[0].mxu0 %v283
    %v389 = vpop.f32.mrb[0].mxu0
    %v390 = vadd.f32 %v305, %v389
    %v391 = vpop.f32.mrb[0].mxu0
    %v392 = vpop.f32.mrb[0].mxu0
    %v393 = vpop.f32.mrb[0].mxu0
    %394 = vdwg.mxu0
    %v395 = vmax.f32 %v390, 0.0
    %v396 = vpack.c.bf16 %v395, %v395
    %v397 = vld [vmem:[#allocation10] sm:$0xf]
    %v398 = vld [vmem:[#allocation10 + $0x4] sm:$0xf]
    %v399 = vld [vmem:[#allocation10 + $0x8] sm:$0xf]
    %v400 = vld [vmem:[#allocation10 + $0xc] sm:$0xf]
    %v401 = vld [vmem:[#allocation10 + $0x10] sm:$0xf]
    %v402 = vld [vmem:[#allocation10 + $0x14] sm:$0xf]
    %v403 = vld [vmem:[#allocation10 + $0x18] sm:$0xf]
    %v404 = vld [vmem:[#allocation10 + $0x1c] sm:$0xf]
    %v405 = vld [vmem:[#allocation10 + $0x20] sm:$0xf]
    %v406 = vld [vmem:[#allocation10 + $0x24] sm:$0xf]
    %v407 = vld [vmem:[#allocation10 + $0x28] sm:$0xf]
    %v408 = vld [vmem:[#allocation10 + $0x2c] sm:$0xf]
    %v409 = vld [vmem:[#allocation10 + $0x30] sm:$0xf]
    %v410 = vld [vmem:[#allocation10 + $0x34] sm:$0xf]
    %v411 = vld [vmem:[#allocation10 + $0x38] sm:$0xf]
    %v412 = vld [vmem:[#allocation10 + $0x3c] sm:$0xf]
    %v413 = vld [vmem:[%s8] sm:$0x1]
    %v415 = vlaneseq
    %v416 = vshrl.u32 %v415, 7
    %v417 = vsub.s32 0, %v416
    %v418 = vrot.slane %v413, %v417
    %v436 = vunpack.c.l.b16 %v397
    %v437 = vunpack.c.l.b16 %v398
    %v438 = vunpack.c.l.b16 %v399
    %v439 = vunpack.c.l.b16 %v400
    %v440 = vunpack.c.l.b16 %v401
    %v441 = vunpack.c.l.b16 %v402
    %v442 = vunpack.c.l.b16 %v403
    %v443 = vunpack.c.l.b16 %v404
    %v444 = vunpack.c.l.b16 %v405
    %v445 = vunpack.c.l.b16 %v406
    %v446 = vunpack.c.l.b16 %v407
    %v447 = vunpack.c.l.b16 %v408
    %v448 = vunpack.c.l.b16 %v409
    %v449 = vunpack.c.l.b16 %v410
    %v450 = vunpack.c.l.b16 %v411
    %v451 = vunpack.c.l.b16 %v412
    %v452 = vpack.c.b16 %v437, %v436
    %v453 = vpack.c.b16 %v439, %v438
    %v454 = vpack.c.b16 %v441, %v440
    %v455 = vpack.c.b16 %v443, %v442
    %v456 = vpack.c.b16 %v445, %v444
    %v457 = vpack.c.b16 %v447, %v446
    %v458 = vpack.c.b16 %v449, %v448
    %v459 = vpack.c.b16 %v451, %v450
    %468 = vmatprep.subr.bf16.mxu0 0
    %469 = vmatpush1.bf16.msra.mxu0 %v452
    %470 = vmatprep.subr.bf16.mxu0 0
    %471 = vmatpush1.bf16.msra.mxu0 %v453
    %472 = vmatprep.subr.bf16.mxu0 0
    %473 = vmatpush1.bf16.msra.mxu0 %v454
    %474 = vmatprep.subr.bf16.mxu0 0
    %475 = vmatpush1.bf16.msra.mxu0 %v455
    %476 = vmatprep.subr.bf16.mxu0 0
    %477 = vmatpush1.bf16.msra.mxu0 %v456
    %478 = vmatprep.subr.bf16.mxu0 0
    %479 = vmatpush1.bf16.msra.mxu0 %v457
    %480 = vmatprep.subr.bf16.mxu0 0
    %481 = vmatpush1.bf16.msra.mxu0 %v458
    %482 = vmatprep.subr.bf16.mxu0 0
    %483 = vmatpush1.bf16.msra.mxu0 %v459
    %484 = vmatprep.subr.bf16.mxu0 0
    %485 = vmatpush1.bf16.msra.mxu0 0
    %486 = vmatprep.subr.bf16.mxu0 0
    %487 = vmatpush1.bf16.msra.mxu0 0
    %488 = vmatprep.subr.bf16.mxu0 0
    %489 = vmatpush1.bf16.msra.mxu0 0
    %490 = vmatprep.subr.bf16.mxu0 0
    %491 = vmatpush1.bf16.msra.mxu0 0
    %492 = vmatprep.subr.bf16.mxu0 0
    %493 = vmatpush1.bf16.msra.mxu0 0
    %494 = vmatprep.subr.bf16.mxu0 0
    %495 = vmatpush1.bf16.msra.mxu0 0
    %496 = vmatprep.subr.bf16.mxu0 0
    %497 = vmatpush1.bf16.msra.mxu0 0
    %498 = vmatprep.subr.bf16.mxu0 0
    %499 = vmatpush1.bf16.msra.mxu0 0
    %500 = vmatprep.mubr.bf16.mxu0 0
    %501 = vmatmul.mubr.bf16.gmra.mrb[0].mxu0 %v396
    %v502 = vpop.f32.mrb[0].mxu0
    %v503 = vadd.f32 %v418, %v502
    %v504 = vpop.f32.mrb[0].mxu0
    %v505 = vpop.f32.mrb[0].mxu0
    %v506 = vpop.f32.mrb[0].mxu0
    %507 = vdwg.mxu0
    %v508 = vmax.f32 %v503, 0.0
    %v509 = vlaneseq
    %v510 = vand.u32 %v509, 127
    %vm511 = vcmp.lt.s32.totalorder %v510, 10
    %v512 = vsel %vm511, %v508, -inf
    %513 = vmax.xlane.f32.xlu0 %v512
    %v514 = vpop.xlane.xlu0 %513
    %v515 = vsub.f32 %v512, %v514
    %v516 = vmul.f32 %v515, 1.442695
    %v517 = vpow.pop %v516
    %518 = vadd.xlane.f32.xlu0 %v517
    %v519 = vpop.xlane.xlu0 %518
    %v520 = vlog2.pop %v519
    %v521 = vmul.f32 %v520, 0.6931472
    %v522 = vsub.f32 %v515, %v521
    %523 = vst [vmem:[#allocation11] sm:$0xff] %v522
    // Predicated region
    $region58: #{tpu_custom_call.1} parent=1 // pred_check
      _
    $region59: #{tpu_custom_call.1} parent=1 // pred_check_branch
      %525 = sbr.rel (0) target = $region61
    $region60: #{tpu_custom_call.1} parent=1 // pred_region
      %s527 = ssub.s32 128, 128
      %528 = vsyncadd [#allocation4], %s527
      %s530 = sshll.u32 [#allocation11], 4
      %s531 = int_to_ptr.vmem [resolvable:$true] %s530
      %533 = dma.vmem_to_hbm [thread:$0]  %s531, 128, %s9, [#allocation4]
    $region61: #{tpu_custom_call.1} parent=1 // pred_fallthru
      _
    // Predicated region
    $region62: #{tpu_custom_call.1} parent=1 // pred_check
      _
    $region63: #{tpu_custom_call.1} parent=1 // pred_check_branch
      %535 = sbr.rel (0) target = $region65
    $region64: #{tpu_custom_call.1} parent=1 // pred_region
      %536 = dma.done [#allocation4], 128
    $region65: #{tpu_custom_call.1} parent=1 // pred_fallthru
      _
    %537 = vsyncpa [#allocation3], 1
    %538 = vsyncpa [#allocation6], 1
    %539 = vsyncpa [#allocation9], 1
    %540 = vsyncpa [#allocation4], 1

</llo_original>
